<compile_context>
chip_gen: v5e
topology: v5e:2x2
jax: 0.10.0
libtpu: 0.0.40
codegen_flags: <defaults>
</compile_context>

<pallas_src>
import functools

import jax
import jax.numpy as jnp
from jax import lax
from jax.experimental import pallas as pl
from jax.experimental.pallas import tpu as pltpu


def _channel_kernel(x_ref, n_ref, c_ref, y_ref, *, n_t, sym):
    # x_ref / n_ref / y_ref : (BB, 2*n_t*sym)  row = [real planes | imag planes]
    # c_ref                 : (BB, 2*n_t*n_t)  [std/S * Uh_r | std/S * Uh_i]
    x = x_ref[...]                                       # (BB, L)

    # ---- power normalization: mean |z|^2 over the n_t*sym complex symbols ----
    pwr = jnp.sum(x * x, axis=1, keepdims=True)          # (BB, 1) lane reduction
    scale = lax.rsqrt(pwr * (1.0 / (n_t * sym)))         # (BB, 1)

    nz = n_ref[...]                                      # (BB, L) unit normals
    coef = c_ref[...]                                    # (BB, 2*n_t*n_t)
    nn = n_t * n_t

    # ---- complex mix diag(1/S) @ Uh @ (std*(Nr + i*Ni)) as VPU broadcast-FMAs,
    #      written slab-by-slab (each slab is a 128-aligned full-width store) ---
    for k in range(n_t):                                 # static unroll (output row)
        mix_r = None
        mix_i = None
        for j in range(n_t):                             # static unroll (contraction)
            nr = nz[:, j * sym:(j + 1) * sym]                        # (BB, sym)
            ni = nz[:, (n_t + j) * sym:(n_t + j + 1) * sym]          # (BB, sym)
            cr = coef[:, k * n_t + j:k * n_t + j + 1]                # (BB, 1)
            ci = coef[:, nn + k * n_t + j:nn + k * n_t + j + 1]      # (BB, 1)
            tr = cr * nr - ci * ni
            ti = ci * nr + cr * ni
            mix_r = tr if mix_r is None else mix_r + tr
            mix_i = ti if mix_i is None else mix_i + ti
        y_ref[:, k * sym:(k + 1) * sym] = (
            x[:, k * sym:(k + 1) * sym] * scale + mix_r)
        y_ref[:, (n_t + k) * sym:(n_t + k + 1) * sym] = (
            x[:, (n_t + k) * sym:(n_t + k + 1) * sym] * scale + mix_i)


def _pick_block_batch(batch, row_len, target_block_bytes=2 << 20):
    """Rows per grid step: ~2 MiB per streamed block (~6 MiB HBM traffic/step),
    sublane-dense (multiple of 8) when blocking, >=2 steps for larger batches so
    both v7x TensorCores get work. Returning `batch` (full dim) is always legal."""
    per_row_bytes = row_len * 4
    bb = max(1, target_block_bytes // per_row_bytes)
    if batch >= 16:
        bb = min(bb, -(-batch // 2))          # leave at least 2 grid steps
    if bb >= batch:
        return batch
    bb = max(8, (bb // 8) * 8)                # multiple of 8 -> full sublane tiles
    return min(bb, batch)


@jax.jit
def channel_forward(inputs, Uh_r, Uh_i, S, snr, noise):
    """inputs: (batch, C, H, W); noise: (batch, 2, N_t, sym) unit normals."""
    in_shape = inputs.shape
    batch = in_shape[0]
    total = inputs.size // batch
    n_t = S.shape[1]
    if total % (2 * n_t) != 0:
        raise ValueError("C*H*W must be divisible by 2*N_t")
    sym = total // (2 * n_t)
    row_len = 2 * n_t * sym                   # == total (pure view of the input)

    x = jnp.asarray(inputs, jnp.float32).reshape(batch, row_len)
    nz = jnp.asarray(noise, jnp.float32).reshape(batch, row_len)

    # Exact per-batch coefficients in the wrapper (no approx reciprocal in-kernel):
    #   coef[:, :n_t^2]  = (std/S)[:,k] * Uh_r[:,k,j]
    #   coef[:, n_t^2:]  = (std/S)[:,k] * Uh_i[:,k,j]
    snr_f = jnp.asarray(snr, jnp.float32).reshape(batch)
    std = jnp.sqrt(10.0 ** (-snr_f / 10.0) * (n_t / 2.0))          # (batch,)
    g = std[:, None] / jnp.asarray(S, jnp.float32)                 # (batch, n_t)
    coef_r = (jnp.asarray(Uh_r, jnp.float32) * g[:, :, None]).reshape(batch, n_t * n_t)
    coef_i = (jnp.asarray(Uh_i, jnp.float32) * g[:, :, None]).reshape(batch, n_t * n_t)
    coef = jnp.concatenate([coef_r, coef_i], axis=1)               # (batch, 2*n_t^2)

    bb = _pick_block_batch(batch, row_len)
    padded = -(-batch // bb) * bb
    if padded != batch:
        pad = padded - batch
        x = jnp.pad(x, ((0, pad), (0, 0)), constant_values=1.0)    # keep pwr > 0
        nz = jnp.pad(nz, ((0, pad), (0, 0)))
        coef = jnp.pad(coef, ((0, pad), (0, 0)))

    grid = (padded // bb,)
    row_spec = pl.BlockSpec((bb, row_len), lambda i: (i, 0))
    coef_spec = pl.BlockSpec((bb, 2 * n_t * n_t), lambda i: (i, 0))

    y = pl.pallas_call(
        functools.partial(_channel_kernel, n_t=n_t, sym=sym),
        out_shape=jax.ShapeDtypeStruct((padded, row_len), jnp.float32),
        grid_spec=pltpu.PrefetchScalarGridSpec(
            num_scalar_prefetch=0,
            grid=grid,
            in_specs=[row_spec, row_spec, coef_spec],
            out_specs=row_spec,
        ),
        compiler_params=pltpu.CompilerParams(
            dimension_semantics=("parallel",),
            vmem_limit_bytes=32 * 1024 * 1024,
        ),
    )(x, nz, coef)

    return y[:batch].reshape(in_shape)        # pure view back to the input shape


def channel_reference(inputs, Uh_r, Uh_i, S, snr, noise):
    """Pure-JAX reference mirroring the PyTorch forward (same noise samples).
    Uses an explicit broadcast-sum complex mix to avoid low-precision matmul paths."""
    in_shape = inputs.shape
    batch = in_shape[0]
    z = jnp.asarray(inputs, jnp.float32).reshape(batch, -1)
    half = z.shape[1] // 2
    zc = z[:, :half] + 1j * z[:, half:]
    ave = jnp.mean(jnp.abs(zc) ** 2, axis=1, keepdims=True)
    zn = zc / jnp.sqrt(ave)
    n_t = S.shape[1]
    X = zn.reshape(batch, n_t, -1)
    std = jnp.sqrt(10.0 ** (-jnp.asarray(snr, jnp.float32) / 10.0) * n_t / 2.0)
    Wc = (noise[:, 0] + 1j * noise[:, 1]) * std[:, None, None]
    Uh = jnp.asarray(Uh_r, jnp.float32) + 1j * jnp.asarray(Uh_i, jnp.float32)
    UhW = jnp.sum(Uh[:, :, :, None] * Wc[:, None, :, :], axis=2)   # (batch, n_t, sym)
    Y = X + (1.0 / S.astype(jnp.complex64))[:, :, None] * UhW
    Yall = Y.reshape(batch, -1)
    out = jnp.concatenate([jnp.real(Yall), jnp.imag(Yall)], axis=1)
    return out.reshape(in_shape).astype(jnp.float32)


if __name__ == "__main__":
    key = jax.random.PRNGKey(0)
    batch, C, H, W = 2, 4, 16, 16          # NCHW feature entering the channel
    n_t = 2                                 # MIMO_num (2x2 MIMO)
    in_shape = (batch, C, H, W)
    total = C * H * W
    sym = total // (2 * n_t)                # symbols per antenna = 256

    k1, k2, k3, k4, k5 = jax.random.split(key, 5)
    inputs = jax.random.normal(k1, in_shape, jnp.float32)
    Uh_r = jax.random.normal(k2, (batch, n_t, n_t), jnp.float32)
    Uh_i = jax.random.normal(k3, (batch, n_t, n_t), jnp.float32)
    S = jnp.abs(jax.random.normal(k4, (batch, n_t), jnp.float32)) + 0.5
    snr = jnp.array([10.0, 15.0], jnp.float32)
    # TODO(synk): torch.normal samples the AWGN inside the PyTorch module; here unit
    # normals are supplied externally (stddev folded into the wrapper coefficients) so
    # the kernel can be bit-checked against a same-noise reference. They could instead
    # be generated in-kernel with pltpu.prng_* to cut ~1/3 of HBM traffic.
    noise = jax.random.normal(k5, (batch, 2, n_t, sym), jnp.float32)

    out = channel_forward(inputs, Uh_r, Uh_i, S, snr, noise)
    out = jax.block_until_ready(out)

    ref = channel_reference(inputs, Uh_r, Uh_i, S, snr, noise)
    assert out.shape == in_shape and out.dtype == jnp.float32
    max_err = float(jnp.max(jnp.abs(out - ref)))
    assert jnp.allclose(out, ref, atol=2e-3, rtol=2e-3), \
        f"mismatch vs pure-JAX reference (max abs err {max_err})"

    print("KERNEL_OK")
</pallas_src>

<mosaic_0001>
module attributes {stable_mosaic.version = 11 : i64} {
  func.func @_channel_kernel(%arg0: i32, %arg1: memref<2x1024xf32, #tpu.memory_space<vmem>>, %arg2: memref<2x1024xf32, #tpu.memory_space<vmem>>, %arg3: memref<2x8xf32, #tpu.memory_space<vmem>>, %arg4: memref<2x1024xf32, #tpu.memory_space<vmem>>) attributes {dimension_semantics = [#tpu.dimension_semantics<parallel>], iteration_bounds = array<i64: 1>, scalar_prefetch = 0 : i64, scratch_operands = 0 : i64, tpu.core_type = #tpu.core_type<tc>, window_params = [{transform_indices = @transform_0, window_bounds = array<i64: 2, 1024>}, {transform_indices = @transform_1, window_bounds = array<i64: 2, 1024>}, {transform_indices = @transform_2, window_bounds = array<i64: 2, 8>}, {transform_indices = @transform_3, window_bounds = array<i64: 2, 1024>}]} {
    %c0 = arith.constant 0 : index
    %c0_0 = arith.constant 0 : index
    %0 = vector.load %arg1[%c0, %c0_0] : memref<2x1024xf32, #tpu.memory_space<vmem>>, vector<2x1024xf32>
    %1 = arith.mulf %0, %0 : vector<2x1024xf32>
    %cst = arith.constant dense<0.000000e+00> : vector<2xf32>
    %2 = vector.multi_reduction <add>, %1, %cst [1] : vector<2x1024xf32> to vector<2xf32>
    %3 = vector.shape_cast %2 : vector<2xf32> to vector<2x1xf32>
    %cst_1 = arith.constant 0.001953125 : f32
    %4 = vector.broadcast %cst_1 : f32 to vector<2x1xf32>
    %5 = arith.mulf %3, %4 : vector<2x1xf32>
    %6 = math.rsqrt %5 : vector<2x1xf32>
    %c0_2 = arith.constant 0 : index
    %c0_3 = arith.constant 0 : index
    %7 = vector.load %arg2[%c0_2, %c0_3] : memref<2x1024xf32, #tpu.memory_space<vmem>>, vector<2x1024xf32>
    %c0_4 = arith.constant 0 : index
    %c0_5 = arith.constant 0 : index
    %8 = vector.load %arg3[%c0_4, %c0_5] : memref<2x8xf32, #tpu.memory_space<vmem>>, vector<2x8xf32>
    %9 = vector.extract_strided_slice %7 {offsets = [0, 0], sizes = [2, 256], strides = [1, 1]} : vector<2x1024xf32> to vector<2x256xf32>
    %10 = vector.extract_strided_slice %7 {offsets = [0, 512], sizes = [2, 256], strides = [1, 1]} : vector<2x1024xf32> to vector<2x256xf32>
    %11 = vector.extract_strided_slice %8 {offsets = [0, 0], sizes = [2, 1], strides = [1, 1]} : vector<2x8xf32> to vector<2x1xf32>
    %12 = vector.extract_strided_slice %8 {offsets = [0, 4], sizes = [2, 1], strides = [1, 1]} : vector<2x8xf32> to vector<2x1xf32>
    %13 = vector.broadcast %11 : vector<2x1xf32> to vector<2x256xf32>
    %14 = arith.mulf %13, %9 : vector<2x256xf32>
    %15 = vector.broadcast %12 : vector<2x1xf32> to vector<2x256xf32>
    %16 = arith.mulf %15, %10 : vector<2x256xf32>
    %17 = arith.subf %14, %16 : vector<2x256xf32>
    %18 = vector.broadcast %12 : vector<2x1xf32> to vector<2x256xf32>
    %19 = arith.mulf %18, %9 : vector<2x256xf32>
    %20 = vector.broadcast %11 : vector<2x1xf32> to vector<2x256xf32>
    %21 = arith.mulf %20, %10 : vector<2x256xf32>
    %22 = arith.addf %19, %21 : vector<2x256xf32>
    %23 = vector.extract_strided_slice %7 {offsets = [0, 256], sizes = [2, 256], strides = [1, 1]} : vector<2x1024xf32> to vector<2x256xf32>
    %24 = vector.extract_strided_slice %7 {offsets = [0, 768], sizes = [2, 256], strides = [1, 1]} : vector<2x1024xf32> to vector<2x256xf32>
    %25 = vector.extract_strided_slice %8 {offsets = [0, 1], sizes = [2, 1], strides = [1, 1]} : vector<2x8xf32> to vector<2x1xf32>
    %26 = vector.extract_strided_slice %8 {offsets = [0, 5], sizes = [2, 1], strides = [1, 1]} : vector<2x8xf32> to vector<2x1xf32>
    %27 = vector.broadcast %25 : vector<2x1xf32> to vector<2x256xf32>
    %28 = arith.mulf %27, %23 : vector<2x256xf32>
    %29 = vector.broadcast %26 : vector<2x1xf32> to vector<2x256xf32>
    %30 = arith.mulf %29, %24 : vector<2x256xf32>
    %31 = arith.subf %28, %30 : vector<2x256xf32>
    %32 = vector.broadcast %26 : vector<2x1xf32> to vector<2x256xf32>
    %33 = arith.mulf %32, %23 : vector<2x256xf32>
    %34 = vector.broadcast %25 : vector<2x1xf32> to vector<2x256xf32>
    %35 = arith.mulf %34, %24 : vector<2x256xf32>
    %36 = arith.addf %33, %35 : vector<2x256xf32>
    %37 = arith.addf %17, %31 : vector<2x256xf32>
    %38 = arith.addf %22, %36 : vector<2x256xf32>
    %39 = vector.extract_strided_slice %0 {offsets = [0, 0], sizes = [2, 256], strides = [1, 1]} : vector<2x1024xf32> to vector<2x256xf32>
    %40 = vector.broadcast %6 : vector<2x1xf32> to vector<2x256xf32>
    %41 = arith.mulf %39, %40 : vector<2x256xf32>
    %42 = arith.addf %41, %37 : vector<2x256xf32>
    %c0_6 = arith.constant 0 : index
    %c0_7 = arith.constant 0 : index
    %43 = vector.load %arg4[%c0_6, %c0_7] : memref<2x1024xf32, #tpu.memory_space<vmem>>, vector<2x256xf32>
    tpu.vector_store %arg4[%c0_6, %c0_7], %42 {strides = array<i32>} : memref<2x1024xf32, #tpu.memory_space<vmem>>, vector<2x256xf32>,
    %44 = vector.extract_strided_slice %0 {offsets = [0, 512], sizes = [2, 256], strides = [1, 1]} : vector<2x1024xf32> to vector<2x256xf32>
    %45 = vector.broadcast %6 : vector<2x1xf32> to vector<2x256xf32>
    %46 = arith.mulf %44, %45 : vector<2x256xf32>
    %47 = arith.addf %46, %38 : vector<2x256xf32>
    %c0_8 = arith.constant 0 : index
    %c512 = arith.constant 512 : index
    %48 = vector.load %arg4[%c0_8, %c512] : memref<2x1024xf32, #tpu.memory_space<vmem>>, vector<2x256xf32>
    tpu.vector_store %arg4[%c0_8, %c512], %47 {strides = array<i32>} : memref<2x1024xf32, #tpu.memory_space<vmem>>, vector<2x256xf32>,
    %49 = vector.extract_strided_slice %7 {offsets = [0, 0], sizes = [2, 256], strides = [1, 1]} : vector<2x1024xf32> to vector<2x256xf32>
    %50 = vector.extract_strided_slice %7 {offsets = [0, 512], sizes = [2, 256], strides = [1, 1]} : vector<2x1024xf32> to vector<2x256xf32>
    %51 = vector.extract_strided_slice %8 {offsets = [0, 2], sizes = [2, 1], strides = [1, 1]} : vector<2x8xf32> to vector<2x1xf32>
    %52 = vector.extract_strided_slice %8 {offsets = [0, 6], sizes = [2, 1], strides = [1, 1]} : vector<2x8xf32> to vector<2x1xf32>
    %53 = vector.broadcast %51 : vector<2x1xf32> to vector<2x256xf32>
    %54 = arith.mulf %53, %49 : vector<2x256xf32>
    %55 = vector.broadcast %52 : vector<2x1xf32> to vector<2x256xf32>
    %56 = arith.mulf %55, %50 : vector<2x256xf32>
    %57 = arith.subf %54, %56 : vector<2x256xf32>
    %58 = vector.broadcast %52 : vector<2x1xf32> to vector<2x256xf32>
    %59 = arith.mulf %58, %49 : vector<2x256xf32>
    %60 = vector.broadcast %51 : vector<2x1xf32> to vector<2x256xf32>
    %61 = arith.mulf %60, %50 : vector<2x256xf32>
    %62 = arith.addf %59, %61 : vector<2x256xf32>
    %63 = vector.extract_strided_slice %7 {offsets = [0, 256], sizes = [2, 256], strides = [1, 1]} : vector<2x1024xf32> to vector<2x256xf32>
    %64 = vector.extract_strided_slice %7 {offsets = [0, 768], sizes = [2, 256], strides = [1, 1]} : vector<2x1024xf32> to vector<2x256xf32>
    %65 = vector.extract_strided_slice %8 {offsets = [0, 3], sizes = [2, 1], strides = [1, 1]} : vector<2x8xf32> to vector<2x1xf32>
    %66 = vector.extract_strided_slice %8 {offsets = [0, 7], sizes = [2, 1], strides = [1, 1]} : vector<2x8xf32> to vector<2x1xf32>
    %67 = vector.broadcast %65 : vector<2x1xf32> to vector<2x256xf32>
    %68 = arith.mulf %67, %63 : vector<2x256xf32>
    %69 = vector.broadcast %66 : vector<2x1xf32> to vector<2x256xf32>
    %70 = arith.mulf %69, %64 : vector<2x256xf32>
    %71 = arith.subf %68, %70 : vector<2x256xf32>
    %72 = vector.broadcast %66 : vector<2x1xf32> to vector<2x256xf32>
    %73 = arith.mulf %72, %63 : vector<2x256xf32>
    %74 = vector.broadcast %65 : vector<2x1xf32> to vector<2x256xf32>
    %75 = arith.mulf %74, %64 : vector<2x256xf32>
    %76 = arith.addf %73, %75 : vector<2x256xf32>
    %77 = arith.addf %57, %71 : vector<2x256xf32>
    %78 = arith.addf %62, %76 : vector<2x256xf32>
    %79 = vector.extract_strided_slice %0 {offsets = [0, 256], sizes = [2, 256], strides = [1, 1]} : vector<2x1024xf32> to vector<2x256xf32>
    %80 = vector.broadcast %6 : vector<2x1xf32> to vector<2x256xf32>
    %81 = arith.mulf %79, %80 : vector<2x256xf32>
    %82 = arith.addf %81, %77 : vector<2x256xf32>
    %c0_9 = arith.constant 0 : index
    %c256 = arith.constant 256 : index
    %83 = vector.load %arg4[%c0_9, %c256] : memref<2x1024xf32, #tpu.memory_space<vmem>>, vector<2x256xf32>
    tpu.vector_store %arg4[%c0_9, %c256], %82 {strides = array<i32>} : memref<2x1024xf32, #tpu.memory_space<vmem>>, vector<2x256xf32>,
    %84 = vector.extract_strided_slice %0 {offsets = [0, 768], sizes = [2, 256], strides = [1, 1]} : vector<2x1024xf32> to vector<2x256xf32>
    %85 = vector.broadcast %6 : vector<2x1xf32> to vector<2x256xf32>
    %86 = arith.mulf %84, %85 : vector<2x256xf32>
    %87 = arith.addf %86, %78 : vector<2x256xf32>
    %c0_10 = arith.constant 0 : index
    %c768 = arith.constant 768 : index
    %88 = vector.load %arg4[%c0_10, %c768] : memref<2x1024xf32, #tpu.memory_space<vmem>>, vector<2x256xf32>
    tpu.vector_store %arg4[%c0_10, %c768], %87 {strides = array<i32>} : memref<2x1024xf32, #tpu.memory_space<vmem>>, vector<2x256xf32>,
    return
  }
  func.func @transform_0(%arg0: i32) -> (i32, i32) {
    %c0_i32 = arith.constant 0 : i32
    %c0_i32_0 = arith.constant 0 : i32
    return %arg0, %c0_i32 : i32, i32
  }
  func.func @transform_1(%arg0: i32) -> (i32, i32) {
    %c0_i32 = arith.constant 0 : i32
    %c0_i32_0 = arith.constant 0 : i32
    return %arg0, %c0_i32 : i32, i32
  }
  func.func @transform_2(%arg0: i32) -> (i32, i32) {
    %c0_i32 = arith.constant 0 : i32
    %c0_i32_0 = arith.constant 0 : i32
    return %arg0, %c0_i32 : i32, i32
  }
  func.func @transform_3(%arg0: i32) -> (i32, i32) {
    %c0_i32 = arith.constant 0 : i32
    %c0_i32_0 = arith.constant 0 : i32
    return %arg0, %c0_i32 : i32, i32
  }
}

</mosaic_0001>

<llo_original>
// kernel: channel_forward.1
$region0: #{channel_forward.1}
  #allocation0 [shape = 'u32[]', space=smem, size = 0x4, offset = 0x4, fixed_abs, tag = 'smem constant byte address 0x4 - core index']
  #allocation1 [shape = 'u32[72,128]{1,0:T(1,128)}', space=vmem, size = 0x9000, scoped, tag = 'internal scratch']
  %s0 = inlined_call_operand.vmem [shape: f32[2,1024], index: 0, kind: input, shape index: {}]
  %s1 = inlined_call_operand.vmem [shape: f32[2,1024], index: 1, kind: input, shape index: {}]
  %s2 = inlined_call_operand.vmem [shape: f32[2,8], index: 2, kind: input, shape index: {}]
  %s3 = inlined_call_operand.vmem [shape: f32[2,1024], index: 3, kind: output, shape index: {}]
  %s4 = sld [smem:[#allocation0]]
  $region22: #{channel_forward.1} parent=0
    _
  %s6 = ssub.s32 1, %s4
  %s7 = scalar_select 0, %s6, %s4
  // Predicated region
  $region2: #{channel_forward.1} parent=0 // pred_check
    _
  $region3: #{channel_forward.1} parent=0 // pred_check_branch
    %9 = sbr.rel (0) target = $region5
  $region4: #{channel_forward.1} parent=0 // pred_region
    _
  $region5: #{channel_forward.1} parent=0 // pred_fallthru
    _
  // Predicated region
  $region6: #{channel_forward.1} parent=0 // pred_check
    _
  $region7: #{channel_forward.1} parent=0 // pred_check_branch
    %11 = sbr.rel (0) target = $region9
  $region8: #{channel_forward.1} parent=0 // pred_region
    _
  $region9: #{channel_forward.1} parent=0 // pred_fallthru
    _
  // Predicated region
  $region10: #{channel_forward.1} parent=0 // pred_check
    _
  $region11: #{channel_forward.1} parent=0 // pred_check_branch
    %13 = sbr.rel (0) target = $region13
  $region12: #{channel_forward.1} parent=0 // pred_region
    _
  $region13: #{channel_forward.1} parent=0 // pred_fallthru
    _
  %v14 = vld [vmem:[%s0] sm:$0xff]
  %v15 = vld [vmem:[%s0 + $0x8] sm:$0xff]
  %v16 = vmul.f32 %v14, %v14
  %v17 = vmul.f32 %v15, %v15
  %20 = vst [vmem:[#allocation1] ss:$4 sm:$0xff] %v16
  %s21 = scalar_lea.vmem [#allocation1], 32
  %22 = vst [vmem:[%s21] ss:$4 sm:$0xff] %v17
  %v23 = vld.sshfl [vmem:[#allocation1] sm:$0xff pattern:$0x73625140]
  %v24 = vld.sshfl [vmem:[#allocation1 + $0x8] sm:$0xff pattern:$0x73625140]
  %v25 = vld.sshfl [vmem:[#allocation1 + $0x10] sm:$0xff pattern:$0x73625140]
  %v26 = vld.sshfl [vmem:[#allocation1 + $0x18] sm:$0xff pattern:$0x73625140]
  %v27 = vld.sshfl [vmem:[#allocation1 + $0x20] sm:$0xff pattern:$0x73625140]
  %v28 = vld.sshfl [vmem:[#allocation1 + $0x28] sm:$0xff pattern:$0x73625140]
  %v29 = vld.sshfl [vmem:[#allocation1 + $0x30] sm:$0xff pattern:$0x73625140]
  %v30 = vld.sshfl [vmem:[#allocation1 + $0x38] sm:$0xff pattern:$0x73625140]
  %vm39 = vcmask 1041408
  %v40 = vsel %vm39, %v23, 0.0
  %v41 = vsel %vm39, %v24, 0.0
  %v42 = vadd.f32 %v40, %v41
  %v43 = vsel %vm39, %v25, 0.0
  %v44 = vadd.f32 %v42, %v43
  %v45 = vsel %vm39, %v26, 0.0
  %v46 = vadd.f32 %v44, %v45
  %v47 = vsel %vm39, %v27, 0.0
  %v48 = vadd.f32 %v46, %v47
  %v49 = vsel %vm39, %v28, 0.0
  %v50 = vadd.f32 %v48, %v49
  %v51 = vsel %vm39, %v29, 0.0
  %v52 = vadd.f32 %v50, %v51
  %v53 = vsel %vm39, %v30, 0.0
  %v54 = vadd.f32 %v52, %v53
  %55 = vadd.xlane.f32.xlu0 %v54
  %v56 = vpop.xlane.xlu0 %55
  %v57 = vmul.f32 %v56, 0.001953125
  %v58 = vrsqrt.pop %v57
  %v59 = vmul.f32 %v58, %v57
  %v60 = vmul.f32 %v59, %v58
  %v61 = vmul.f32 0.5, %v60
  %v62 = vsub.f32 1.5, %v61
  %v63 = vmul.f32 %v58, %v62
  %vm64 = vweird.f32 %v57
  %vm65 = vweird.f32 %v58
  %vm66 = vmor %vm64, %vm65
  %v67 = vsel %vm66, %v58, %v63
  %v68 = vld [vmem:[%s1] sm:$0xff]
  %v69 = vld [vmem:[%s1 + $0x8] sm:$0xff]
  %v70 = vld [vmem:[%s2] sm:$0x3]
  %72 = vset.pattern.permute.xlu0 0
  %73 = vperm.xlu0 %72, %v70
  %v74 = vpop.permute.xlu0 %73
  %77 = vst [vmem:[#allocation1] ss:$4 sm:$0xff] %v68
  %v78 = vld.sshfl [vmem:[#allocation1] sm:$0xff pattern:$0x73625140]
  %v79 = vld.sshfl [vmem:[#allocation1 + $0x8] sm:$0xff pattern:$0x73625140]
  %v82 = vmul.f32 %v74, %v78
  %v83 = vmul.f32 %v74, %v79
  %84 = vset.pattern.permute.xlu0 4
  %85 = vperm.xlu0 %84, %v70
  %v86 = vpop.permute.xlu0 %85
  %89 = vst [vmem:[#allocation1] ss:$4 sm:$0xff] %v69
  %v90 = vld.sshfl [vmem:[#allocation1] sm:$0xff pattern:$0x73625140]
  %v91 = vld.sshfl [vmem:[#allocation1 + $0x8] sm:$0xff pattern:$0x73625140]
  %v94 = vmul.f32 %v86, %v90
  %v95 = vmul.f32 %v86, %v91
  %v96 = vsub.f32 %v82, %v94
  %v97 = vsub.f32 %v83, %v95
  %98 = vst [vmem:[#allocation1] ss:$4 sm:$0xff] %v68
  %v99 = vld.sshfl [vmem:[#allocation1] sm:$0xff pattern:$0x73625140]
  %v100 = vld.sshfl [vmem:[#allocation1 + $0x8] sm:$0xff pattern:$0x73625140]
  %v103 = vmul.f32 %v86, %v99
  %v104 = vmul.f32 %v86, %v100
  %105 = vst [vmem:[#allocation1] ss:$4 sm:$0xff] %v69
  %v106 = vld.sshfl [vmem:[#allocation1] sm:$0xff pattern:$0x73625140]
  %v107 = vld.sshfl [vmem:[#allocation1 + $0x8] sm:$0xff pattern:$0x73625140]
  %v110 = vmul.f32 %v74, %v106
  %v111 = vmul.f32 %v74, %v107
  %v112 = vadd.f32 %v103, %v110
  %v113 = vadd.f32 %v104, %v111
  %114 = vset.pattern.permute.xlu0 1
  %115 = vperm.xlu0 %114, %v70
  %v116 = vpop.permute.xlu0 %115
  %118 = vst [vmem:[#allocation1] ss:$4 sm:$0xff] %v68
  %v119 = vld.sshfl [vmem:[#allocation1 + $0x10] sm:$0xff pattern:$0x73625140]
  %v120 = vld.sshfl [vmem:[#allocation1 + $0x18] sm:$0xff pattern:$0x73625140]
  %v123 = vmul.f32 %v116, %v119
  %v124 = vmul.f32 %v116, %v120
  %125 = vset.pattern.permute.xlu0 5
  %126 = vperm.xlu0 %125, %v70
  %v127 = vpop.permute.xlu0 %126
  %129 = vst [vmem:[#allocation1] ss:$4 sm:$0xff] %v69
  %v130 = vld.sshfl [vmem:[#allocation1 + $0x10] sm:$0xff pattern:$0x73625140]
  %v131 = vld.sshfl [vmem:[#allocation1 + $0x18] sm:$0xff pattern:$0x73625140]
  %v134 = vmul.f32 %v127, %v130
  %v135 = vmul.f32 %v127, %v131
  %v136 = vsub.f32 %v123, %v134
  %v137 = vsub.f32 %v124, %v135
  %138 = vst [vmem:[#allocation1] ss:$4 sm:$0xff] %v68
  %v139 = vld.sshfl [vmem:[#allocation1 + $0x10] sm:$0xff pattern:$0x73625140]
  %v140 = vld.sshfl [vmem:[#allocation1 + $0x18] sm:$0xff pattern:$0x73625140]
  %v143 = vmul.f32 %v127, %v139
  %v144 = vmul.f32 %v127, %v140
  %145 = vst [vmem:[#allocation1] ss:$4 sm:$0xff] %v69
  %v146 = vld.sshfl [vmem:[#allocation1 + $0x10] sm:$0xff pattern:$0x73625140]
  %v147 = vld.sshfl [vmem:[#allocation1 + $0x18] sm:$0xff pattern:$0x73625140]
  %v150 = vmul.f32 %v116, %v146
  %v151 = vmul.f32 %v116, %v147
  %v152 = vadd.f32 %v143, %v150
  %v153 = vadd.f32 %v144, %v151
  %v154 = vadd.f32 %v96, %v136
  %v155 = vadd.f32 %v97, %v137
  %v156 = vadd.f32 %v112, %v152
  %v157 = vadd.f32 %v113, %v153
  %v160 = vunpack.c.l.s4 269488144
  %v161 = vunpack.c.0.s8 %v160
  %v162 = vperm.slane %v67, %v161
  %v164 = vmul.f32 %v14, %v162
  %v167 = vrot.slane %v155, 6
  %v168 = vsel %vm39, %v154, %v167
  %v170 = vadd.f32 %v164, %v168
  %171 = vst [vmem:[%s3] sm:$0xf] %v170
  %v172 = vmul.f32 %v15, %v162
  %v175 = vrot.slane %v157, 6
  %v176 = vsel %vm39, %v156, %v175
  %v178 = vadd.f32 %v172, %v176
  %179 = vst [vmem:[%s3 + $0x8] sm:$0xf] %v178
  %180 = vset.pattern.permute.xlu0 2
  %181 = vperm.xlu0 %180, %v70
  %v182 = vpop.permute.xlu0 %181
  %184 = vst [vmem:[#allocation1] ss:$4 sm:$0xff] %v68
  %v185 = vld.sshfl [vmem:[#allocation1] sm:$0xff pattern:$0x73625140]
  %v186 = vld.sshfl [vmem:[#allocation1 + $0x8] sm:$0xff pattern:$0x73625140]
  %v189 = vmul.f32 %v182, %v185
  %v190 = vmul.f32 %v182, %v186
  %191 = vset.pattern.permute.xlu0 6
  %192 = vperm.xlu0 %191, %v70
  %v193 = vpop.permute.xlu0 %192
  %195 = vst [vmem:[#allocation1] ss:$4 sm:$0xff] %v69
  %v196 = vld.sshfl [vmem:[#allocation1] sm:$0xff pattern:$0x73625140]
  %v197 = vld.sshfl [vmem:[#allocation1 + $0x8] sm:$0xff pattern:$0x73625140]
  %v200 = vmul.f32 %v193, %v196
  %v201 = vmul.f32 %v193, %v197
  %v202 = vsub.f32 %v189, %v200
  %v203 = vsub.f32 %v190, %v201
  %204 = vst [vmem:[#allocation1] ss:$4 sm:$0xff] %v68
  %v205 = vld.sshfl [vmem:[#allocation1] sm:$0xff pattern:$0x73625140]
  %v206 = vld.sshfl [vmem:[#allocation1 + $0x8] sm:$0xff pattern:$0x73625140]
  %v209 = vmul.f32 %v193, %v205
  %v210 = vmul.f32 %v193, %v206
  %211 = vst [vmem:[#allocation1] ss:$4 sm:$0xff] %v69
  %v212 = vld.sshfl [vmem:[#allocation1] sm:$0xff pattern:$0x73625140]
  %v213 = vld.sshfl [vmem:[#allocation1 + $0x8] sm:$0xff pattern:$0x73625140]
  %v216 = vmul.f32 %v182, %v212
  %v217 = vmul.f32 %v182, %v213
  %v218 = vadd.f32 %v209, %v216
  %v219 = vadd.f32 %v210, %v217
  %220 = vset.pattern.permute.xlu0 3
  %221 = vperm.xlu0 %220, %v70
  %v222 = vpop.permute.xlu0 %221
  %224 = vst [vmem:[#allocation1] ss:$4 sm:$0xff] %v68
  %v225 = vld.sshfl [vmem:[#allocation1 + $0x10] sm:$0xff pattern:$0x73625140]
  %v226 = vld.sshfl [vmem:[#allocation1 + $0x18] sm:$0xff pattern:$0x73625140]
  %v229 = vmul.f32 %v222, %v225
  %v230 = vmul.f32 %v222, %v226
  %231 = vset.pattern.permute.xlu0 7
  %232 = vperm.xlu0 %231, %v70
  %v233 = vpop.permute.xlu0 %232
  %235 = vst [vmem:[#allocation1] ss:$4 sm:$0xff] %v69
  %v236 = vld.sshfl [vmem:[#allocation1 + $0x10] sm:$0xff pattern:$0x73625140]
  %v237 = vld.sshfl [vmem:[#allocation1 + $0x18] sm:$0xff pattern:$0x73625140]
  %v240 = vmul.f32 %v233, %v236
  %v241 = vmul.f32 %v233, %v237
  %v242 = vsub.f32 %v229, %v240
  %v243 = vsub.f32 %v230, %v241
  %244 = vst [vmem:[#allocation1] ss:$4 sm:$0xff] %v68
  %v245 = vld.sshfl [vmem:[#allocation1 + $0x10] sm:$0xff pattern:$0x73625140]
  %v246 = vld.sshfl [vmem:[#allocation1 + $0x18] sm:$0xff pattern:$0x73625140]
  %v249 = vmul.f32 %v233, %v245
  %v250 = vmul.f32 %v233, %v246
  %251 = vst [vmem:[#allocation1] ss:$4 sm:$0xff] %v69
  %v252 = vld.sshfl [vmem:[#allocation1 + $0x10] sm:$0xff pattern:$0x73625140]
  %v253 = vld.sshfl [vmem:[#allocation1 + $0x18] sm:$0xff pattern:$0x73625140]
  %v256 = vmul.f32 %v222, %v252
  %v257 = vmul.f32 %v222, %v253
  %v258 = vadd.f32 %v249, %v256
  %v259 = vadd.f32 %v250, %v257
  %v260 = vadd.f32 %v202, %v242
  %v261 = vadd.f32 %v203, %v243
  %v262 = vadd.f32 %v218, %v258
  %v263 = vadd.f32 %v219, %v259
  %v265 = vrot.slane %v14, 4
  %v267 = vmul.f32 %v265, %v162
  %v270 = vrot.slane %v261, 6
  %v271 = vsel %vm39, %v260, %v270
  %v273 = vadd.f32 %v267, %v271
  %274 = vst [vmem:[%s3 + $0x4] sm:$0xf] %v273
  %v276 = vrot.slane %v15, 4
  %v278 = vmul.f32 %v276, %v162
  %v281 = vrot.slane %v263, 6
  %v282 = vsel %vm39, %v262, %v281
  %v284 = vadd.f32 %v278, %v282
  %285 = vst [vmem:[%s3 + $0xc] sm:$0xf] %v284
  // Predicated region
  $region14: #{channel_forward.1} parent=0 // pred_check
    _
  $region15: #{channel_forward.1} parent=0 // pred_check_branch
    %287 = sbr.rel (0) target = $region17
  $region16: #{channel_forward.1} parent=0 // pred_region
    _
  $region17: #{channel_forward.1} parent=0 // pred_fallthru
    _
  // Predicated region
  $region18: #{channel_forward.1} parent=0 // pred_check
    _
  $region19: #{channel_forward.1} parent=0 // pred_check_branch
    %289 = sbr.rel (0) target = $region21
  $region20: #{channel_forward.1} parent=0 // pred_region
    _
  $region21: #{channel_forward.1} parent=0 // pred_fallthru
    _

</llo_original>
